<compile_context>
chip_gen: v5e
topology: v5e:2x2
jax: 0.10.0
libtpu: 0.0.40
codegen_flags: <defaults>
</compile_context>

<pallas_src>
import functools

import numpy as np
import jax
import jax.numpy as jnp
from jax.experimental import pallas as pl
from jax.experimental.pallas import tpu as pltpu


# (Cin, Cout) of the 12 conv layers of CNN_BM.
LAYER_CH = [(5, 16), (16, 32), (32, 64),
            (64, 64), (64, 64), (64, 64), (64, 64), (64, 64), (64, 64),
            (64, 32), (32, 16), (16, 5)]
RESID_SAVE = 2       # activation saved after conv3 (+ReLU)  -> xr
RESID_ADD = 8        # xr added back after conv9 (+ReLU), before conv10
ABS_CHANNELS = (0, 4)
SMALL_CIN = 16       # layers with cin <= 16 pack all 9 (kh,kw) taps into K

# Row order of the edge-clamp mask array handed to the kernel.
_MASK_ROW = {("W", 1): 0, ("W", -1): 1,
             ("H", 1): 2, ("H", -1): 3,
             ("D", 1): 4, ("D", -1): 5}


def _round_up(v, m):
    return (v + m - 1) // m * m


# ----------------------------------------------------------------------------
# One-time probe of pltpu.roll's direction convention (vs jnp.roll).  The main
# kernel's stencil shifts depend on the sign; this removes any ambiguity.
_ROLL_LIKE_JNP = None


def _roll_like_jnp():
    global _ROLL_LIKE_JNP
    if _ROLL_LIKE_JNP is None:
        x = np.arange(8 * 128, dtype=np.float32).reshape(8, 128)

        def kern(x_ref, o_ref):
            o_ref[...] = pltpu.roll(x_ref[...], shift=1, axis=1)

        y = np.asarray(pl.pallas_call(
            kern, out_shape=jax.ShapeDtypeStruct((8, 128), jnp.float32)
        )(jnp.asarray(x)))
        if np.array_equal(y, np.roll(x, 1, axis=1)):
            _ROLL_LIKE_JNP = True
        elif np.array_equal(y, np.roll(x, -1, axis=1)):
            _ROLL_LIKE_JNP = False
        else:
            raise AssertionError("unexpected pltpu.roll semantics")
    return _ROLL_LIKE_JNP


# ----------------------------------------------------------------------------
# Kernel
def _cnn_bm_kernel(*refs, D, H, W, layer_dims, roll_like_jnp):
    x_ref, masks_ref, o_ref = refs[0], refs[1], refs[-1]
    params = refs[2:-1]                      # 12 x (weight_ref, bias_ref)
    n = D * H * W
    steps = {"W": 1, "H": W, "D": H * W}

    # Edge-clamp masks: (1, n) f32 row per (axis, direction), loaded once.
    edge_f = {key: masks_ref[r:r + 1, :] for key, r in _MASK_ROW.items()}

    def shift(v, axis, s):
        """y[:, n] = v[:, n + s*step] for interior voxels, v[:, n] at the volume
        edge (replicate padding).  Interior samples come from an XLU lane-roll of
        the flattened (D,H,W) axis; the clamped edge rows keep their own value."""
        if s == 0:
            return v
        delta = s * steps[axis]
        amt = (-delta) % n if roll_like_jnp else delta % n
        rolled = pltpu.roll(v, shift=amt, axis=1)
        m = jnp.broadcast_to(edge_f[(axis, s)], v.shape) > 0.5
        return jnp.where(m, v, rolled)

    x = x_ref[0]                             # (C, n) f32, channels on sublanes
    xr = None
    for li, (coutp, small) in enumerate(layer_dims):
        w_ref, b_ref = params[2 * li], params[2 * li + 1]
        xb = x.astype(jnp.bfloat16)          # one cast per layer; shifts on bf16
        xw = [shift(xb, "W", kw - 1) for kw in range(3)]
        acc = None
        if small:
            # (kh, kw) taps packed into the MXU contraction, kd taps in the
            # output rows: one (3*coutp, 9*cin) x (9*cin, n) matmul.
            xk = jnp.concatenate(
                [shift(xw[kw], "H", kh - 1)
                 for kh in range(3) for kw in range(3)], axis=0)
            y = jnp.dot(w_ref[...], xk, preferred_element_type=jnp.float32)
            for kd in range(3):
                slab = shift(y[kd * coutp:(kd + 1) * coutp, :], "D", kd - 1)
                acc = slab if acc is None else acc + slab
        else:
            # kw taps packed into K, kh taps in the output rows, kd looped:
            # three (3*cout, 3*cin) x (3*cin, n) matmuls per layer.
            xk = jnp.concatenate(xw, axis=0)
            for kd in range(3):
                y = jnp.dot(w_ref[kd], xk, preferred_element_type=jnp.float32)
                s_kd = None
                for kh in range(3):
                    slab = shift(y[kh * coutp:(kh + 1) * coutp, :], "H", kh - 1)
                    s_kd = slab if s_kd is None else s_kd + slab
                s_kd = shift(s_kd, "D", kd - 1)
                acc = s_kd if acc is None else acc + s_kd

        acc = acc + b_ref[...]               # (coutp, 1) f32 bias, lane-broadcast
        if li < len(layer_dims) - 1:
            acc = jnp.maximum(acc, 0.0)
        x = acc
        if li == RESID_SAVE:
            xr = x
        elif li == RESID_ADD:
            x = x + xr

    # xp = x.clone(); xp[:, [0, 4]] = abs(x[:, [0, 4]])  -> abs on channel rows.
    row = jax.lax.broadcasted_iota(jnp.int32, x.shape, 0)
    is_abs = (row == ABS_CHANNELS[0]) | (row == ABS_CHANNELS[1])
    y = jnp.where(is_abs, jnp.abs(x), x)
    o_ref[0] = y[:LAYER_CH[-1][1], :]        # drop the padded output rows


# ----------------------------------------------------------------------------
# Wrapper
def _vmem_limit_bytes():
    try:
        cap = int(pltpu.get_tpu_info().vmem_capacity_bytes)
    except Exception:
        cap = 64 * 1024 * 1024
    # ~25% headroom for the pipeliner's buffers, capped at 100 MiB.
    return int(max(48 * 1024 * 1024, min(cap * 3 // 4, 100 * 1024 * 1024)))


def _edge_mask_array(D, H, W):
    """(6, N) float32: 1.0 where the replicate-clamped neighbour is the voxel
    itself, one row per (axis, shift-direction) as in _MASK_ROW."""
    d, h, w = np.meshgrid(np.arange(D), np.arange(H), np.arange(W), indexing="ij")
    d, h, w = d.ravel(), h.ravel(), w.ravel()
    rows = np.zeros((6, D * H * W), np.float32)
    rows[_MASK_ROW[("W", 1)]] = (w == W - 1)
    rows[_MASK_ROW[("W", -1)]] = (w == 0)
    rows[_MASK_ROW[("H", 1)]] = (h == H - 1)
    rows[_MASK_ROW[("H", -1)]] = (h == 0)
    rows[_MASK_ROW[("D", 1)]] = (d == D - 1)
    rows[_MASK_ROW[("D", -1)]] = (d == 0)
    return jnp.asarray(rows)


def cnn_bm_forward(x_ncdhw, params):
    """x_ncdhw: (B, 5, D, H, W) float32 (PyTorch layout).
    params: 12 x (fused bf16 weight, (coutp, 1) f32 bias) from make_params."""
    B, c0, D, H, W = x_ncdhw.shape
    n = D * H * W
    c_out = LAYER_CH[-1][1]
    c0p = _round_up(c0, 16)

    # Channels-first flattening keeps the big spatial axis on lanes: HBM<->VMEM
    # blocks are lane-dense and the volume never needs a transpose.
    x_flat = x_ncdhw.reshape(B, c0, n)
    x_flat = jnp.pad(x_flat, ((0, 0), (0, c0p - c0), (0, 0)))
    masks = _edge_mask_array(D, H, W)

    in_specs = [pl.BlockSpec((1, c0p, n), lambda b: (b, 0, 0)),
                pl.BlockSpec(masks.shape, lambda b: (0, 0))]
    args = [x_flat, masks]
    layer_dims = []
    for (w, bias), (cin, cout) in zip(params, LAYER_CH):
        layer_dims.append((bias.shape[0], cin <= SMALL_CIN))
        in_specs.append(pl.BlockSpec(w.shape, lambda b, nd=w.ndim: (0,) * nd))
        in_specs.append(pl.BlockSpec(bias.shape, lambda b: (0, 0)))
        args.extend([w, bias])

    out_flat = pl.pallas_call(
        functools.partial(_cnn_bm_kernel, D=D, H=H, W=W,
                          layer_dims=tuple(layer_dims),
                          roll_like_jnp=_roll_like_jnp()),
        out_shape=jax.ShapeDtypeStruct((B, c_out, n), jnp.float32),
        grid=(B,),
        in_specs=in_specs,
        out_specs=pl.BlockSpec((1, c_out, n), lambda b: (b, 0, 0)),
        compiler_params=pltpu.CompilerParams(
            dimension_semantics=("parallel",),     # batch across TCs on megacore
            vmem_limit_bytes=_vmem_limit_bytes(),
        ),
    )(*args)
    return out_flat.reshape(B, c_out, D, H, W)


# ----------------------------------------------------------------------------
# Parameters (fused MXU layouts + plain reference copies)
def make_params(key):
    """Returns (params_kernel, params_ref).

    Kernel layouts (weights bf16, derived from w[kd,kh,kw,ci,co]; to load the
    torch module's weights permute torch's (co,ci,kd,kh,kw) to (kd,kh,kw,ci,co)):
      * cin <= 16: (3*coutp, 9*cinp) with row kd*coutp+co, col (kh*3+kw)*cinp+ci,
      * otherwise: (3, 3*cout, 3*cin) with w[kd][kh*cout+co, kw*cin+ci],
    plus a (coutp, 1) float32 bias (coutp = cout rounded up to 8)."""
    params_kernel, params_ref = [], []
    for (cin, cout), k in zip(LAYER_CH, jax.random.split(key, len(LAYER_CH))):
        k_w, k_b = jax.random.split(k)
        w = jax.random.normal(k_w, (3, 3, 3, cin, cout), jnp.float32)
        w = w * (2.0 / (27 * cin)) ** 0.5
        b = jax.random.uniform(k_b, (cout,), jnp.float32, -0.05, 0.05)
        w_bf = w.astype(jnp.bfloat16)
        # Reference uses the same bf16-rounded weights (in f32) so the only
        # kernel/reference delta is the bf16 activation rounding at the MXU.
        params_ref.append((w_bf.astype(jnp.float32), b))

        if cin <= SMALL_CIN:
            cinp = _round_up(cin, 16)
            coutp = _round_up(cout, 8)
            wp = jnp.pad(w_bf, ((0, 0), (0, 0), (0, 0),
                                (0, cinp - cin), (0, coutp - cout)))
            wk = jnp.transpose(wp, (0, 4, 1, 2, 3)).reshape(3 * coutp, 9 * cinp)
            bk = jnp.pad(b, (0, coutp - cout)).reshape(coutp, 1)
        else:
            wk = jnp.transpose(w_bf, (0, 1, 4, 2, 3)).reshape(3, 3 * cout, 3 * cin)
            bk = b.reshape(cout, 1)
        params_kernel.append((wk, bk))
    return params_kernel, params_ref


# ----------------------------------------------------------------------------
# Pure-JAX reference (f32, lax conv on an edge-padded input)
def reference_forward(x_ncdhw, params_ref):
    x = jnp.transpose(x_ncdhw, (0, 2, 3, 4, 1))            # NDHWC

    def conv(x, w, b):
        xp = jnp.pad(x, ((0, 0), (1, 1), (1, 1), (1, 1), (0, 0)), mode="edge")
        y = jax.lax.conv_general_dilated(
            xp, w, window_strides=(1, 1, 1), padding="VALID",
            dimension_numbers=("NDHWC", "DHWIO", "NDHWC"),
            precision=jax.lax.Precision.HIGHEST,
            preferred_element_type=jnp.float32)
        return y + b

    xr = None
    for li, (w, b) in enumerate(params_ref):
        x = conv(x, w, b)
        if li < len(params_ref) - 1:
            x = jnp.maximum(x, 0.0)
        if li == RESID_SAVE:
            xr = x
        elif li == RESID_ADD:
            x = x + xr
    mask = jnp.zeros((x.shape[-1],), bool).at[jnp.array(ABS_CHANNELS)].set(True)
    x = jnp.where(mask, jnp.abs(x), x)
    return jnp.transpose(x, (0, 4, 1, 2, 3))               # back to NCDHW


if __name__ == "__main__":
    B, D, H, W = 2, 4, 8, 8                                 # small test volume
    key = jax.random.PRNGKey(0)
    kx, kp = jax.random.split(key)
    x = jax.random.normal(kx, (B, LAYER_CH[0][0], D, H, W), jnp.float32)

    params_kernel, params_ref = make_params(kp)

    out = jax.block_until_ready(cnn_bm_forward(x, params_kernel))
    ref = jax.block_until_ready(reference_forward(x, params_ref))

    assert out.shape == (B, LAYER_CH[-1][1], D, H, W), out.shape
    # Tolerance covers bf16 activation rounding across 12 fused conv layers.
    np.testing.assert_allclose(np.asarray(out), np.asarray(ref),
                               rtol=5e-2, atol=5e-2)
    print("KERNEL_OK")
</pallas_src>

<mosaic_0001>
module attributes {stable_mosaic.version = 11 : i64} {
  func.func @kern(%arg0: memref<8x128xf32, #tpu.memory_space<vmem>>, %arg1: memref<8x128xf32, #tpu.memory_space<vmem>>) attributes {dimension_semantics = [], scalar_prefetch = 0 : i64, scratch_operands = 0 : i64, tpu.core_type = #tpu.core_type<tc>} {
    %c0 = arith.constant 0 : index
    %c0_0 = arith.constant 0 : index
    %0 = vector.load %arg0[%c0, %c0_0] : memref<8x128xf32, #tpu.memory_space<vmem>>, vector<8x128xf32>
    %c1_i32 = arith.constant 1 : i32
    %1 = tpu.dynamic_rotate %0 by %c1_i32 dim 1 : vector<8x128xf32>, i32 -> vector<8x128xf32>
    %c0_1 = arith.constant 0 : index
    %c0_2 = arith.constant 0 : index
    %2 = vector.load %arg1[%c0_1, %c0_2] : memref<8x128xf32, #tpu.memory_space<vmem>>, vector<8x128xf32>
    tpu.vector_store %arg1[%c0_1, %c0_2], %1 {strides = array<i32>} : memref<8x128xf32, #tpu.memory_space<vmem>>, vector<8x128xf32>,
    return
  }
}

</mosaic_0001>

<llo_original>
// kernel: tpu_custom_call.1
$region0: #{tpu_custom_call.1}
  #allocation0 [shape = 'u32[]', space=smem, size = 0x4, offset = 0x4, fixed_abs, tag = 'smem constant byte address 0x4 - core index']
  #allocation1 [shape = 'u32[72,128]{1,0:T(1,128)}', space=vmem, size = 0x9000, scoped, tag = 'internal scratch']
  %s0 = inlined_call_operand.hbm [shape: f32[8,128], index: 0, kind: input, shape index: {}]
  %s1 = inlined_call_operand.hbm [shape: f32[8,128], index: 1, kind: output, shape index: {}]
  %s2 = sld [smem:[#allocation0]]
  $region18: #{tpu_custom_call.1} parent=0
    _
  %s4 = ssub.s32 1, %s2
  %s5 = scalar_select 0, %s4, %s2
  $region1: #{tpu_custom_call.1} parent=0
    #allocation2 [shape = 'u8[4096]{0}', space=vmem, size = 0x1000, scoped, tag = 'input window, operand 0, single buffered']
    #allocation3 [shape = 's32[1]{0}', space=sflag, size = 0x4, scoped, tag = 'scoped memory for tpu_custom_call.1']
    #allocation4 [shape = 's32[1]{0}', space=sflag, size = 0x4, scoped, tag = 'scoped memory for tpu_custom_call.1']
    #allocation5 [shape = 'u8[4096]{0}', space=vmem, size = 0x1000, scoped, tag = 'output window, operand 0, single buffered']
    %6 = vsyncpa [#allocation3], 0
    %7 = vsyncpa [#allocation4], 0
    // Predicated region
    $region2: #{tpu_custom_call.1} parent=1 // pred_check
      _
    $region3: #{tpu_custom_call.1} parent=1 // pred_check_branch
      %9 = sbr.rel (0) target = $region5
    $region4: #{tpu_custom_call.1} parent=1 // pred_region
      %11 = vsyncadd [#allocation3], 0
      %s13 = sshll.u32 %s0, 4
      %s14 = int_to_ptr.hbm [resolvable:$true] %s13
      %s15 = sshll.u32 [#allocation2], 4
      %s16 = int_to_ptr.vmem [resolvable:$true] %s15
      %18 = dma.hbm_to_vmem [thread:$0]  %s14, 128, %s16, [#allocation3]
    $region5: #{tpu_custom_call.1} parent=1 // pred_fallthru
      _
    // Predicated region
    $region6: #{tpu_custom_call.1} parent=1 // pred_check
      _
    $region7: #{tpu_custom_call.1} parent=1 // pred_check_branch
      %20 = sbr.rel (0) target = $region9
    $region8: #{tpu_custom_call.1} parent=1 // pred_region
      %22 = dma.done [#allocation3], 128
    $region9: #{tpu_custom_call.1} parent=1 // pred_fallthru
      _
    %v23 = vld [vmem:[#allocation2] sm:$0xff]
    %24 = vrot.lane.b32.xlu0 %v23, 1
    %v25 = vpop.permute.xlu0 %24
    %26 = vst [vmem:[#allocation5] sm:$0xff] %v25
    // Predicated region
    $region10: #{tpu_custom_call.1} parent=1 // pred_check
      _
    $region11: #{tpu_custom_call.1} parent=1 // pred_check_branch
      %28 = sbr.rel (0) target = $region13
    $region12: #{tpu_custom_call.1} parent=1 // pred_region
      %30 = vsyncadd [#allocation4], 0
      %s32 = sshll.u32 [#allocation5], 4
      %s33 = int_to_ptr.vmem [resolvable:$true] %s32
      %s34 = sshll.u32 %s1, 4
      %s35 = int_to_ptr.hbm [resolvable:$true] %s34
      %37 = dma.vmem_to_hbm [thread:$0]  %s33, 128, %s35, [#allocation4]
    $region13: #{tpu_custom_call.1} parent=1 // pred_fallthru
      _
    // Predicated region
    $region14: #{tpu_custom_call.1} parent=1 // pred_check
      _
    $region15: #{tpu_custom_call.1} parent=1 // pred_check_branch
      %39 = sbr.rel (0) target = $region17
    $region16: #{tpu_custom_call.1} parent=1 // pred_region
      %41 = dma.done [#allocation4], 128
    $region17: #{tpu_custom_call.1} parent=1 // pred_fallthru
      _
    %42 = vsyncpa [#allocation3], 1
    %43 = vsyncpa [#allocation4], 1

</llo_original>
